<compile_context>
chip_gen: v6e
topology: v6e:2x2x1
jax: 0.10.0
libtpu: 0.0.40
codegen_flags: <defaults>
</compile_context>

<pallas_src>
import functools

import jax
import jax.numpy as jnp
from jax.experimental import pallas as pl
from jax.experimental.pallas import tpu as pltpu


def _round_up(x, m):
    return (x + m - 1) // m * m


# --------------------------------------------------------------------------
# Kernel 1 (normalize path): streamed column logsumexp of E + log_softmax(T).
# E is presented as (Vp, W) with W = K*C (K vocab rows packed per lane row;
# W == 128 when packing is on, otherwise W == C and K == 1).
# --------------------------------------------------------------------------
def _lse_trans_kernel(e_ref, t_ref, lse_ref, trans_ref, m_ref, s_ref,
                      *, vp, tile_rows, k, c):
    v = pl.program_id(0)

    @pl.when(v == 0)
    def _():
        m_ref[...] = jnp.full_like(m_ref, -jnp.inf)
        s_ref[...] = jnp.zeros_like(s_ref)

    tile = e_ref[...]                                      # (tile_rows, W) f32
    if vp % tile_rows != 0:
        # Mask rows of the partial last tile that fall beyond Vp.
        row_ids = (jax.lax.broadcasted_iota(jnp.int32, tile.shape, 0)
                   + v * tile_rows)
        tile = jnp.where(row_ids < vp, tile, -jnp.inf)

    tile_max = jnp.max(tile, axis=0, keepdims=True)        # (1, W)
    m_prev = m_ref[...]
    m_new = jnp.maximum(m_prev, tile_max)
    s_ref[...] = (s_ref[...] * jnp.exp(m_prev - m_new)
                  + jnp.sum(jnp.exp(tile - m_new), axis=0, keepdims=True))
    m_ref[...] = m_new

    @pl.when(v == pl.num_programs(0) - 1)
    def _():
        m = m_ref[...]
        s = s_ref[...]
        if k > 1:
            # Fold the K packed groups down to C lanes with an XLU roll tree:
            # merge((m1,s1),(m2,s2)) = (max, rescaled sum).  log2(K) steps,
            # one-time cost at the final grid step.
            w = k * c                                       # == 128
            width = w
            while width > c:
                half = width // 2
                m2 = pltpu.roll(m, shift=w - half, axis=1)
                s2 = pltpu.roll(s, shift=w - half, axis=1)
                mn = jnp.maximum(m, m2)
                s = s * jnp.exp(m - mn) + s2 * jnp.exp(m2 - mn)
                m = mn
                width = half
            lse = (m + jnp.log(s))[:, :c]
        else:
            lse = m + jnp.log(s)
        lse_ref[...] = lse

        t = t_ref[...]
        t_max = jnp.max(t, axis=-1, keepdims=True)
        t_lse = jnp.log(jnp.sum(jnp.exp(t - t_max), axis=-1,
                                keepdims=True)) + t_max
        trans_ref[...] = t - t_lse


# --------------------------------------------------------------------------
# Kernel 2: G tokens per grid step.  G pl.Element row gathers of E, optional
# -lse correction, single where(valid, row, -inf) select + store per row.
# --------------------------------------------------------------------------
def _emit_kernel(words_sref, mask_sref, *refs, g, normalize):
    del words_sref   # consumed by the pl.Element index_maps (scalar prefetch)
    if normalize:
        e_rows, lse_ref, emit_ref = refs[:g], refs[g], refs[g + 1]
        lse = lse_ref[...]                                  # (1, C), resident
    else:
        e_rows, emit_ref = refs[:g], refs[g]

    base = pl.program_id(0) * g
    for gi in range(g):
        row = e_rows[gi][...]                               # (1, C) gathered row
        if normalize:
            row = row - lse                                 # == log_softmax(E,0)[w]
        valid = mask_sref[base + gi] != 0
        emit_ref[pl.ds(gi, 1), :] = jnp.where(
            valid, row, jnp.full_like(row, -jnp.inf))


# --------------------------------------------------------------------------
# Wrapper
# --------------------------------------------------------------------------
def pos_model_forward(words, mask, E, T, *, normalize_paras=False,
                      v_tile_bytes=4 << 20, gather_block=16):
    """words: (B, S) int, mask: (B, S) bool, E: (V, C) f32, T: (C, C) f32."""
    B, S = words.shape
    V, C = E.shape
    N = B * S
    G = gather_block

    E32 = E.astype(jnp.float32)

    # TODO(synk): PyTorch F.embedding errors on out-of-range indices; we clamp
    # instead so the data-dependent row-gather DMA stays in bounds.
    N_pad = _round_up(N, G)
    words_flat = jnp.clip(words.reshape(-1).astype(jnp.int32), 0, V - 1)
    mask_flat = mask.reshape(-1).astype(jnp.int32)
    if N_pad != N:
        words_flat = jnp.pad(words_flat, (0, N_pad - N))    # word 0, mask 0
        mask_flat = jnp.pad(mask_flat, (0, N_pad - N))

    if normalize_paras:
        # ---- pass 1: column LSE of E (streamed over V) + log_softmax(T) ----
        if C < 128 and 128 % C == 0 and V % (128 // C) == 0:
            K = 128 // C                      # vocab rows packed per lane row
        else:
            K = 1
        W = K * C
        Vp = V // K
        E_stream = E32.reshape(Vp, W) if K > 1 else E32     # free row-major view

        rows_budget = max(8, (v_tile_bytes // (W * 4)) // 8 * 8)
        if Vp <= rows_budget:
            tile_rows, n_tiles = Vp, 1
        else:
            tile_rows = rows_budget
            n_tiles = (Vp + rows_budget - 1) // rows_budget

        # Only request extra scoped VMEM if the double-buffered tile would not
        # fit the smallest (v5e) default budget.
        tile_bytes = tile_rows * W * 4
        cp_kwargs = {}
        if 2 * tile_bytes + (4 << 20) > (16 << 20):
            cp_kwargs["vmem_limit_bytes"] = min(2 * tile_bytes + (8 << 20),
                                                56 << 20)

        lse, trans = pl.pallas_call(
            functools.partial(_lse_trans_kernel, vp=Vp, tile_rows=tile_rows,
                              k=K, c=C),
            out_shape=(jax.ShapeDtypeStruct((1, C), jnp.float32),
                       jax.ShapeDtypeStruct((C, C), jnp.float32)),
            grid_spec=pltpu.PrefetchScalarGridSpec(
                num_scalar_prefetch=0,
                grid=(n_tiles,),
                in_specs=[pl.BlockSpec((tile_rows, W), lambda v: (v, 0)),
                          pl.BlockSpec((C, C), lambda v: (0, 0))],
                out_specs=(pl.BlockSpec((1, C), lambda v: (0, 0)),
                           pl.BlockSpec((C, C), lambda v: (0, 0))),
                scratch_shapes=[pltpu.VMEM((1, W), jnp.float32),
                                pltpu.VMEM((1, W), jnp.float32)]),
            compiler_params=pltpu.CompilerParams(
                dimension_semantics=("arbitrary",), **cp_kwargs),
        )(E_stream, T.astype(jnp.float32))
    else:
        trans = T                    # untouched: no normalization, no HBM trip

    # ---- pass 2: G-token-per-step row gather of E + mask fill --------------
    row_specs = [
        pl.BlockSpec((pl.Element(1), C),
                     lambda i, w, m, g=g: (w[i * G + g], 0))
        for g in range(G)
    ]
    in_specs = list(row_specs)
    operands = [E32] * G
    if normalize_paras:
        in_specs.append(pl.BlockSpec((1, C), lambda i, w, m: (0, 0)))
        operands.append(lse)

    emit_flat = pl.pallas_call(
        functools.partial(_emit_kernel, g=G, normalize=normalize_paras),
        out_shape=jax.ShapeDtypeStruct((N_pad, C), jnp.float32),
        grid_spec=pltpu.PrefetchScalarGridSpec(
            num_scalar_prefetch=2,
            grid=(N_pad // G,),
            in_specs=in_specs,
            out_specs=pl.BlockSpec((G, C), lambda i, w, m: (i, 0))),
        compiler_params=pltpu.CompilerParams(
            dimension_semantics=("parallel",)),
    )(words_flat, mask_flat, *operands)

    emit = emit_flat[:N].reshape(B, S, C)
    return emit, trans


# --------------------------------------------------------------------------
# Pure-JAX reference
# --------------------------------------------------------------------------
def _reference_forward(words, mask, E, T, *, normalize_paras=False):
    log_e = jax.nn.log_softmax(E, axis=0) if normalize_paras else E
    emit = log_e[words]                                   # (B, S, C)
    emit = jnp.where(mask[..., None], emit, -jnp.inf)
    trans = jax.nn.log_softmax(T, axis=-1) if normalize_paras else T
    return emit, trans


if __name__ == "__main__":
    batch, seq_len = 2, 8
    key = jax.random.PRNGKey(0)

    # (n_words, n_cpos, kwargs):
    #  - (4000, 16, small tiles): packed K=8 streaming LSE, 4 V tiles with a
    #    partial last tile, 2 emit grid steps of 8 tokens.
    #  - (4000, 16, defaults)   : single V tile, 16-token emit blocks.
    #  - (1000, 45, small tiles): unpacked K=1 fallback path, partial tile.
    cases = [
        (4000, 16, dict(v_tile_bytes=64 * 1024, gather_block=8)),
        (4000, 16, dict()),
        (1000, 45, dict(v_tile_bytes=64 * 1024, gather_block=8)),
    ]

    for n_words, n_cpos, kwargs in cases:
        k_e, k_t, k_w = jax.random.split(jax.random.fold_in(key, n_words), 3)

        # reset_parameters(): normal_(., 0, 3) for E and T (non-EM branch).
        E = jax.random.normal(k_e, (n_words, n_cpos), dtype=jnp.float32) * 3.0
        T = jax.random.normal(k_t, (n_cpos, n_cpos), dtype=jnp.float32) * 3.0

        words = jax.random.randint(k_w, (batch, seq_len), 0, n_words,
                                   dtype=jnp.int32)
        lengths = jnp.array([seq_len, 5], dtype=jnp.int32)
        mask = jnp.arange(seq_len)[None, :] < lengths[:, None]     # (B, S) bool

        for normalize_paras in (True, False):
            emit, trans = pos_model_forward(words, mask, E, T,
                                            normalize_paras=normalize_paras,
                                            **kwargs)
            emit = jax.block_until_ready(emit)
            trans = jax.block_until_ready(trans)

            ref_emit, ref_trans = _reference_forward(
                words, mask, E, T, normalize_paras=normalize_paras)

            assert emit.shape == (batch, seq_len, n_cpos)
            assert trans.shape == (n_cpos, n_cpos)
            finite = jnp.isfinite(ref_emit)
            assert bool(jnp.all(jnp.isinf(emit) == jnp.isinf(ref_emit)))
            assert bool(jnp.allclose(jnp.where(finite, emit, 0.0),
                                     jnp.where(finite, ref_emit, 0.0),
                                     atol=1e-4, rtol=1e-4))
            assert bool(jnp.allclose(trans, ref_trans, atol=1e-4, rtol=1e-4))

    print("KERNEL_OK")
</pallas_src>

<mosaic_0001>
module attributes {stable_mosaic.version = 11 : i64} {
  func.func @_lse_trans_kernel(%arg0: i32, %arg1: memref<128x128xf32, #tpu.memory_space<vmem>>, %arg2: memref<16x16xf32, #tpu.memory_space<vmem>>, %arg3: memref<1x16xf32, #tpu.memory_space<vmem>>, %arg4: memref<16x16xf32, #tpu.memory_space<vmem>>, %arg5: memref<1x128xf32, #tpu.memory_space<vmem>>, %arg6: memref<1x128xf32, #tpu.memory_space<vmem>>) attributes {dimension_semantics = [#tpu.dimension_semantics<arbitrary>], iteration_bounds = array<i64: 4>, scalar_prefetch = 0 : i64, scratch_operands = 2 : i64, tpu.core_type = #tpu.core_type<tc>, window_params = [{transform_indices = @transform_0, window_bounds = array<i64: 128, 128>}, {pipeline_mode = #tpu.pipeline_mode<synchronous>, transform_indices = @transform_1, window_bounds = array<i64: 16, 16>}, {pipeline_mode = #tpu.pipeline_mode<synchronous>, transform_indices = @transform_2, window_bounds = array<i64: 1, 16>}, {pipeline_mode = #tpu.pipeline_mode<synchronous>, transform_indices = @transform_3, window_bounds = array<i64: 16, 16>}]} {
    %c0_i32 = arith.constant 0 : i32
    %0 = arith.cmpi eq, %arg0, %c0_i32 : i32
    %1 = arith.extui %0 : i1 to i32
    %c0_i32_0 = arith.constant 0 : i32
    %2 = arith.cmpi ne, %1, %c0_i32_0 : i32
    scf.if %2 {
      %cst_13 = arith.constant 0xFF800000 : f32
      %31 = vector.broadcast %cst_13 : f32 to vector<1x128xf32>
      %c0_14 = arith.constant 0 : index
      %c0_15 = arith.constant 0 : index
      %32 = vector.load %arg5[%c0_14, %c0_15] : memref<1x128xf32, #tpu.memory_space<vmem>>, vector<1x128xf32>
      tpu.vector_store %arg5[%c0_14, %c0_15], %31 {strides = array<i32>} : memref<1x128xf32, #tpu.memory_space<vmem>>, vector<1x128xf32>,
      %cst_16 = arith.constant 0.000000e+00 : f32
      %33 = vector.broadcast %cst_16 : f32 to vector<1x128xf32>
      %c0_17 = arith.constant 0 : index
      %c0_18 = arith.constant 0 : index
      %34 = vector.load %arg6[%c0_17, %c0_18] : memref<1x128xf32, #tpu.memory_space<vmem>>, vector<1x128xf32>
      tpu.vector_store %arg6[%c0_17, %c0_18], %33 {strides = array<i32>} : memref<1x128xf32, #tpu.memory_space<vmem>>, vector<1x128xf32>,
    } else {
    }
    %c0 = arith.constant 0 : index
    %c0_1 = arith.constant 0 : index
    %3 = vector.load %arg1[%c0, %c0_1] : memref<128x128xf32, #tpu.memory_space<vmem>>, vector<128x128xf32>
    %4 = tpu.iota {dimensions = array<i32: 0>} : vector<128x128xi32>
    %c128_i32 = arith.constant 128 : i32
    %5 = arith.muli %arg0, %c128_i32 : i32
    %6 = vector.broadcast %5 : i32 to vector<128x128xi32>
    %7 = arith.addi %4, %6 : vector<128x128xi32>
    %c500_i32 = arith.constant 500 : i32
    %8 = vector.broadcast %c500_i32 : i32 to vector<128x128xi32>
    %9 = arith.cmpi slt, %7, %8 : vector<128x128xi32>
    %cst = arith.constant 0xFF800000 : f32
    %10 = vector.broadcast %cst : f32 to vector<128x128xf32>
    %11 = arith.select %9, %3, %10 : vector<128x128xi1>, vector<128x128xf32>
    %cst_2 = arith.constant dense<0xFF800000> : vector<128xf32>
    %12 = vector.multi_reduction <maximumf>, %11, %cst_2 [0] : vector<128x128xf32> to vector<128xf32>
    %13 = vector.shape_cast %12 : vector<128xf32> to vector<1x128xf32>
    %c0_3 = arith.constant 0 : index
    %c0_4 = arith.constant 0 : index
    %14 = vector.load %arg5[%c0_3, %c0_4] : memref<1x128xf32, #tpu.memory_space<vmem>>, vector<1x128xf32>
    %15 = arith.maximumf %14, %13 : vector<1x128xf32>
    %c0_5 = arith.constant 0 : index
    %c0_6 = arith.constant 0 : index
    %16 = vector.load %arg6[%c0_5, %c0_6] : memref<1x128xf32, #tpu.memory_space<vmem>>, vector<1x128xf32>
    %17 = arith.subf %14, %15 : vector<1x128xf32>
    %18 = math.exp %17 : vector<1x128xf32>
    %19 = arith.mulf %16, %18 : vector<1x128xf32>
    %20 = vector.broadcast %15 : vector<1x128xf32> to vector<128x128xf32>
    %21 = arith.subf %11, %20 : vector<128x128xf32>
    %22 = math.exp %21 : vector<128x128xf32>
    %cst_7 = arith.constant dense<0.000000e+00> : vector<128xf32>
    %23 = vector.multi_reduction <add>, %22, %cst_7 [0] : vector<128x128xf32> to vector<128xf32>
    %24 = vector.shape_cast %23 : vector<128xf32> to vector<1x128xf32>
    %25 = arith.addf %19, %24 : vector<1x128xf32>
    %c0_8 = arith.constant 0 : index
    %c0_9 = arith.constant 0 : index
    %26 = vector.load %arg6[%c0_8, %c0_9] : memref<1x128xf32, #tpu.memory_space<vmem>>, vector<1x128xf32>
    tpu.vector_store %arg6[%c0_8, %c0_9], %25 {strides = array<i32>} : memref<1x128xf32, #tpu.memory_space<vmem>>, vector<1x128xf32>,
    %c0_10 = arith.constant 0 : index
    %c0_11 = arith.constant 0 : index
    %27 = vector.load %arg5[%c0_10, %c0_11] : memref<1x128xf32, #tpu.memory_space<vmem>>, vector<1x128xf32>
    tpu.vector_store %arg5[%c0_10, %c0_11], %15 {strides = array<i32>} : memref<1x128xf32, #tpu.memory_space<vmem>>, vector<1x128xf32>,
    %c3_i32 = arith.constant 3 : i32
    %28 = arith.cmpi eq, %arg0, %c3_i32 : i32
    %29 = arith.extui %28 : i1 to i32
    %c0_i32_12 = arith.constant 0 : i32
    %30 = arith.cmpi ne, %29, %c0_i32_12 : i32
    scf.if %30 {
      %c0_13 = arith.constant 0 : index
      %c0_14 = arith.constant 0 : index
      %31 = vector.load %arg5[%c0_13, %c0_14] : memref<1x128xf32, #tpu.memory_space<vmem>>, vector<1x128xf32>
      %c0_15 = arith.constant 0 : index
      %c0_16 = arith.constant 0 : index
      %32 = vector.load %arg6[%c0_15, %c0_16] : memref<1x128xf32, #tpu.memory_space<vmem>>, vector<1x128xf32>
      %c64_i32 = arith.constant 64 : i32
      %33 = tpu.dynamic_rotate %31 by %c64_i32 dim 1 : vector<1x128xf32>, i32 -> vector<1x128xf32>
      %c64_i32_17 = arith.constant 64 : i32
      %34 = tpu.dynamic_rotate %32 by %c64_i32_17 dim 1 : vector<1x128xf32>, i32 -> vector<1x128xf32>
      %35 = arith.maximumf %31, %33 : vector<1x128xf32>
      %36 = arith.subf %31, %35 : vector<1x128xf32>
      %37 = math.exp %36 : vector<1x128xf32>
      %38 = arith.mulf %32, %37 : vector<1x128xf32>
      %39 = arith.subf %33, %35 : vector<1x128xf32>
      %40 = math.exp %39 : vector<1x128xf32>
      %41 = arith.mulf %34, %40 : vector<1x128xf32>
      %42 = arith.addf %38, %41 : vector<1x128xf32>
      %c96_i32 = arith.constant 96 : i32
      %43 = tpu.dynamic_rotate %35 by %c96_i32 dim 1 : vector<1x128xf32>, i32 -> vector<1x128xf32>
      %c96_i32_18 = arith.constant 96 : i32
      %44 = tpu.dynamic_rotate %42 by %c96_i32_18 dim 1 : vector<1x128xf32>, i32 -> vector<1x128xf32>
      %45 = arith.maximumf %35, %43 : vector<1x128xf32>
      %46 = arith.subf %35, %45 : vector<1x128xf32>
      %47 = math.exp %46 : vector<1x128xf32>
      %48 = arith.mulf %42, %47 : vector<1x128xf32>
      %49 = arith.subf %43, %45 : vector<1x128xf32>
      %50 = math.exp %49 : vector<1x128xf32>
      %51 = arith.mulf %44, %50 : vector<1x128xf32>
      %52 = arith.addf %48, %51 : vector<1x128xf32>
      %c112_i32 = arith.constant 112 : i32
      %53 = tpu.dynamic_rotate %45 by %c112_i32 dim 1 : vector<1x128xf32>, i32 -> vector<1x128xf32>
      %c112_i32_19 = arith.constant 112 : i32
      %54 = tpu.dynamic_rotate %52 by %c112_i32_19 dim 1 : vector<1x128xf32>, i32 -> vector<1x128xf32>
      %55 = arith.maximumf %45, %53 : vector<1x128xf32>
      %56 = arith.subf %45, %55 : vector<1x128xf32>
      %57 = math.exp %56 : vector<1x128xf32>
      %58 = arith.mulf %52, %57 : vector<1x128xf32>
      %59 = arith.subf %53, %55 : vector<1x128xf32>
      %60 = math.exp %59 : vector<1x128xf32>
      %61 = arith.mulf %54, %60 : vector<1x128xf32>
      %62 = arith.addf %58, %61 : vector<1x128xf32>
      %63 = math.log %62 : vector<1x128xf32>
      %64 = arith.addf %55, %63 : vector<1x128xf32>
      %65 = vector.extract_strided_slice %64 {offsets = [0, 0], sizes = [1, 16], strides = [1, 1]} : vector<1x128xf32> to vector<1x16xf32>
      %c0_20 = arith.constant 0 : index
      %c0_21 = arith.constant 0 : index
      %66 = vector.load %arg3[%c0_20, %c0_21] : memref<1x16xf32, #tpu.memory_space<vmem>>, vector<1x16xf32>
      tpu.vector_store %arg3[%c0_20, %c0_21], %65 {strides = array<i32>} : memref<1x16xf32, #tpu.memory_space<vmem>>, vector<1x16xf32>,
      %c0_22 = arith.constant 0 : index
      %c0_23 = arith.constant 0 : index
      %67 = vector.load %arg2[%c0_22, %c0_23] : memref<16x16xf32, #tpu.memory_space<vmem>>, vector<16x16xf32>
      %cst_24 = arith.constant dense<0xFF800000> : vector<16xf32>
      %68 = vector.multi_reduction <maximumf>, %67, %cst_24 [1] : vector<16x16xf32> to vector<16xf32>
      %69 = vector.shape_cast %68 : vector<16xf32> to vector<16x1xf32>
      %70 = vector.broadcast %69 : vector<16x1xf32> to vector<16x16xf32>
      %71 = arith.subf %67, %70 : vector<16x16xf32>
      %72 = math.exp %71 : vector<16x16xf32>
      %cst_25 = arith.constant dense<0.000000e+00> : vector<16xf32>
      %73 = vector.multi_reduction <add>, %72, %cst_25 [1] : vector<16x16xf32> to vector<16xf32>
      %74 = vector.shape_cast %73 : vector<16xf32> to vector<16x1xf32>
      %75 = math.log %74 : vector<16x1xf32>
      %76 = arith.addf %75, %69 : vector<16x1xf32>
      %77 = vector.broadcast %76 : vector<16x1xf32> to vector<16x16xf32>
      %78 = arith.subf %67, %77 : vector<16x16xf32>
      %c0_26 = arith.constant 0 : index
      %c0_27 = arith.constant 0 : index
      %79 = vector.load %arg4[%c0_26, %c0_27] : memref<16x16xf32, #tpu.memory_space<vmem>>, vector<16x16xf32>
      tpu.vector_store %arg4[%c0_26, %c0_27], %78 {strides = array<i32>} : memref<16x16xf32, #tpu.memory_space<vmem>>, vector<16x16xf32>,
    } else {
    }
    return
  }
  func.func @transform_0(%arg0: i32) -> (i32, i32) {
    %c0_i32 = arith.constant 0 : i32
    %c0_i32_0 = arith.constant 0 : i32
    return %arg0, %c0_i32 : i32, i32
  }
  func.func @transform_1(%arg0: i32) -> (i32, i32) {
    %c0_i32 = arith.constant 0 : i32
    %c0_i32_0 = arith.constant 0 : i32
    %c0_i32_1 = arith.constant 0 : i32
    return %c0_i32, %c0_i32_0 : i32, i32
  }
  func.func @transform_2(%arg0: i32) -> (i32, i32) {
    %c0_i32 = arith.constant 0 : i32
    %c0_i32_0 = arith.constant 0 : i32
    %c0_i32_1 = arith.constant 0 : i32
    return %c0_i32, %c0_i32_0 : i32, i32
  }
  func.func @transform_3(%arg0: i32) -> (i32, i32) {
    %c0_i32 = arith.constant 0 : i32
    %c0_i32_0 = arith.constant 0 : i32
    %c0_i32_1 = arith.constant 0 : i32
    return %c0_i32, %c0_i32_0 : i32, i32
  }
}

</mosaic_0001>

<llo_original>
// kernel: tpu_custom_call.1
$region0: #{tpu_custom_call.1}
  #allocation0 [shape = 'u32[]', space=smem, size = 0x4, offset = 0x4, fixed_abs, tag = 'smem constant byte address 0x4 - core index']
  #allocation1 [shape = 'u32[144,128]{1,0:T(1,128)}', space=vmem, size = 0x12000, scoped, tag = 'internal scratch']
  #allocation2 [shape = 'f32[1,128]{1,0:T(1,128)}', space=vmem, size = 0x200, scoped, tag = 'scratch operand']
  #allocation3 [shape = 'f32[1,128]{1,0:T(1,128)}', space=vmem, size = 0x200, scoped, tag = 'scratch operand']
  %s0 = inlined_call_operand.hbm [shape: f32[500,128], index: 0, kind: input, shape index: {}]
  %s1 = inlined_call_operand.hbm [shape: f32[16,16], index: 1, kind: input, shape index: {}]
  %s2 = inlined_call_operand.hbm [shape: f32[1,16], index: 2, kind: output, shape index: {0}]
  %s3 = inlined_call_operand.hbm [shape: f32[16,16], index: 3, kind: output, shape index: {1}]
  %4 = xla_tuple %s2, %s3
  %s5 = sld [smem:[#allocation0]]
  $region65: #{tpu_custom_call.1} parent=0
    _
  %s7 = ssub.s32 1, %s5
  %s8 = scalar_select 0, %s7, %s5
  $region1: #{tpu_custom_call.1} parent=0
    #allocation4 [shape = 'u8[131072]{0}', space=vmem, size = 0x20000, scoped, tag = 'input window, operand 0']
    #allocation5 [shape = 's32[2]{0}', space=sflag, size = 0x8, scoped, tag = 'scoped memory for tpu_custom_call.1']
    #allocation6 [shape = 's32[2]{0}', space=sflag, size = 0x8, scoped, tag = 'scoped memory for tpu_custom_call.1']
    #allocation7 [shape = 'u8[8192]{0}', space=vmem, size = 0x2000, scoped, tag = 'input window, operand 1, single buffered']
    #allocation8 [shape = 's32[1]{0}', space=sflag, size = 0x4, scoped, tag = 'scoped memory for tpu_custom_call.1']
    #allocation9 [shape = 'u8[512]{0}', space=vmem, size = 0x400, scoped, tag = 'output window, operand 0, single buffered']
    #allocation10 [shape = 'u8[8192]{0}', space=vmem, size = 0x2000, scoped, tag = 'output window, operand 1, single buffered']
    #allocation11 [shape = 's32[1]{0}', space=sflag, size = 0x4, scoped, tag = 'scoped memory for tpu_custom_call.1']
    %9 = vsyncpa [#allocation5], 0
    %s10 = scalar_lea.sflag [#allocation5], 1
    %11 = vsyncpa %s10, 0
    %12 = vsyncpa [#allocation8], 0
    %13 = vsyncpa [#allocation6], 0
    %14 = vsyncpa [#allocation11], 0
    loop: start=0, step=1, limit=6
    $region2: #{tpu_custom_call.1} parent=1 // loop_pre_header
      _
    $region3: #{tpu_custom_call.1} parent=1 // loop_header
      %s16 = sphi 0, %s20
      %p17 = scmp.ge.s32.totalorder %s16, 6
      %s26 = sphi 0, %s28
      %s29 = sphi 0, %s26
      %s30 = sphi 0, %s29
      %s46 = sphi 0, %s30
      %s50 = sphi 0, %s50
      %s52 = sphi 0, %s50
      %s53 = sphi 0, %s52
      %s67 = sphi 0, %s53
      %s71 = sphi 0, %s71
      %s73 = sphi 0, %s71
      %s74 = sphi 0, %s73
      %s88 = sphi 0, %s74
      %s92 = sphi 0, %s92
      %s94 = sphi 0, %s92
      %s95 = sphi 0, %s94
      %s109 = sphi 0, %s95
    $region4: #{tpu_custom_call.1} parent=1 // loop_header_branch
      %19 = sbr.rel (%p17) target = $region8
    $region5: #{tpu_custom_call.1} parent=1 // loop_body
      %s21 = ssub.s32 %s16, 1
      %s22 = ssub.s32 %s16, 2
      %s23 = sadd.s32 %s16, 1
      %s24 = ssub.s32 %s16, %s23
      %p25 = scmp.eq.s32.totalorder %s24, 0
      %s27 = sadd.s32 %s26, 1
      %s28 = scalar_select %p25, %s26, %s27
      %p31 = pneg %p25
      %p32 = scmp.eq.s32.totalorder %s16, 3
      %p33 = por %p31, %p32
      %p34 = scmp.ne.s32.totalorder %s26, %s29
      %p35 = scmp.eq.s32.totalorder %s16, 0
      %p36 = por %p34, %p35
      %p37 = scmp.ne.s32.totalorder %s26, %s29
      %p38 = scmp.eq.s32.totalorder %s21, 3
      %p39 = por %p37, %p38
      %p40 = scmp.ne.s32.totalorder %s29, %s30
      %p41 = scmp.eq.s32.totalorder %s21, 0
      %p42 = por %p40, %p41
      %p43 = scmp.ne.s32.totalorder %s29, %s30
      %p44 = scmp.eq.s32.totalorder %s22, 3
      %p45 = por %p43, %p44
      %p47 = scmp.ne.s32.totalorder %s30, %s46
      %p48 = scmp.eq.s32.totalorder %s22, 0
      %p49 = por %p47, %p48
      %s51 = sadd.s32 %s50, 1
      %p54 = scmp.eq.s32.totalorder %s16, 3
      %p55 = scmp.ne.s32.totalorder %s50, %s52
      %p56 = scmp.eq.s32.totalorder %s16, 0
      %p57 = por %p55, %p56
      %p58 = scmp.ne.s32.totalorder %s50, %s52
      %p59 = scmp.eq.s32.totalorder %s21, 3
      %p60 = por %p58, %p59
      %p61 = scmp.ne.s32.totalorder %s52, %s53
      %p62 = scmp.eq.s32.totalorder %s21, 0
      %p63 = por %p61, %p62
      %p64 = scmp.ne.s32.totalorder %s52, %s53
      %p65 = scmp.eq.s32.totalorder %s22, 3
      %p66 = por %p64, %p65
      %p68 = scmp.ne.s32.totalorder %s53, %s67
      %p69 = scmp.eq.s32.totalorder %s22, 0
      %p70 = por %p68, %p69
      %s72 = sadd.s32 %s71, 1
      %p75 = scmp.eq.s32.totalorder %s16, 3
      %p76 = scmp.ne.s32.totalorder %s71, %s73
      %p77 = scmp.eq.s32.totalorder %s16, 0
      %p78 = por %p76, %p77
      %p79 = scmp.ne.s32.totalorder %s71, %s73
      %p80 = scmp.eq.s32.totalorder %s21, 3
      %p81 = por %p79, %p80
      %p82 = scmp.ne.s32.totalorder %s73, %s74
      %p83 = scmp.eq.s32.totalorder %s21, 0
      %p84 = por %p82, %p83
      %p85 = scmp.ne.s32.totalorder %s73, %s74
      %p86 = scmp.eq.s32.totalorder %s22, 3
      %p87 = por %p85, %p86
      %p89 = scmp.ne.s32.totalorder %s74, %s88
      %p90 = scmp.eq.s32.totalorder %s22, 0
      %p91 = por %p89, %p90
      %s93 = sadd.s32 %s92, 1
      %p96 = scmp.eq.s32.totalorder %s16, 3
      %p97 = scmp.ne.s32.totalorder %s92, %s94
      %p98 = scmp.eq.s32.totalorder %s16, 0
      %p99 = por %p97, %p98
      %p100 = scmp.ne.s32.totalorder %s92, %s94
      %p101 = scmp.eq.s32.totalorder %s21, 3
      %p102 = por %p100, %p101
      %p103 = scmp.ne.s32.totalorder %s94, %s95
      %p104 = scmp.eq.s32.totalorder %s21, 0
      %p105 = por %p103, %p104
      %p106 = scmp.ne.s32.totalorder %s94, %s95
      %p107 = scmp.eq.s32.totalorder %s22, 3
      %p108 = por %p106, %p107
      %p110 = scmp.ne.s32.totalorder %s95, %s109
      %p111 = scmp.eq.s32.totalorder %s22, 0
      %p112 = por %p110, %p111
      %p113 = scmp.le.s32.totalorder 1, %s16
      %p114 = scmp.lt.s32.totalorder %s16, 5
      %p115 = pnand %p113, %p114
      %p116 = pneg %p115
      // Predicated region
      $region9: #{tpu_custom_call.1} parent=5 // pred_check
        _
      $region10: #{tpu_custom_call.1} parent=5 // pred_check_branch
        %118 = sbr.rel (%p115) target = $region12
      $region11: #{tpu_custom_call.1} parent=5 // pred_region
        %s119 = ssub.s32 %s16, 1
        // Predicated region
        $region13: #{tpu_custom_call.1} parent=11 // pred_check
          %p120 = pneg %p63
        $region14: #{tpu_custom_call.1} parent=11 // pred_check_branch
          %122 = sbr.rel (%p120) target = $region16
        $region15: #{tpu_custom_call.1} parent=11 // pred_region
          %s124 = ssub.s32 256, 256
          %125 = vsyncadd [#allocation8], %s124
          %s126 = sshll.u32 [#allocation7], 4
          %s127 = int_to_ptr.vmem [resolvable:$true] %s126
          %132 = dma.hbm_to_vmem [thread:$0]  %s1, 256, %s127, [#allocation8], 128, 128, 8
        $region16: #{tpu_custom_call.1} parent=11 // pred_fallthru
          _
      $region12: #{tpu_custom_call.1} parent=5 // pred_fallthru
        _
      %p133 = scmp.lt.s32.totalorder %s16, 4
      // Predicated region
      $region17: #{tpu_custom_call.1} parent=5 // pred_check
        %p134 = pneg %p133
      $region18: #{tpu_custom_call.1} parent=5 // pred_check_branch
        %136 = sbr.rel (%p134) target = $region20
      $region19: #{tpu_custom_call.1} parent=5 // pred_region
        // Predicated region
        $region21: #{tpu_custom_call.1} parent=19 // pred_check
          %p137 = pneg %p36
        $region22: #{tpu_custom_call.1} parent=19 // pred_check_branch
          %139 = sbr.rel (%p137) target = $region24
        $region23: #{tpu_custom_call.1} parent=19 // pred_region
          %s140 = sand.u32 %s26, 1
          %s141 = scalar_lea.sflag [#allocation5], %s140
          %s142 = sand.u32 %s26, 1
          %s143 = smul.addr %s142, 128
          %s144 = scalar_lea.vmem [#allocation4], %s143
          %s145 = smul.u32 16, %s16
          %s146 = ssub.s32 63, %s145
          %p147 = scmp.lt.s32.totalorder %s146, 16
          %s148 = scalar_select %p147, %s146, 16
          %s149 = smul.u32 128, %s148
          %s151 = ssub.s32 2048, %s149
          %152 = vsyncadd %s141, %s151
          %p153 = scmp.ne.s32.totalorder 0, %s149
          %s154 = smul.addr %s145, 128
          %s155 = scalar_lea.hbm %s0, %s154
          %s156 = smul.u32 8, %s148
          %s157 = sshll.u32 %s144, 4
          %s158 = int_to_ptr.vmem [resolvable:$true] %s157
          %s159 = sshll.u32 %s156, 4
          %163 = dma.hbm_to_vmem [thread:$0]  (%p153), %s155, %s159, %s158, %s141, 128, 128, 8
        $region24: #{tpu_custom_call.1} parent=19 // pred_fallthru
          _
      $region20: #{tpu_custom_call.1} parent=5 // pred_fallthru
        _
      %p164 = scmp.le.s32.totalorder 1, %s16
      %p165 = scmp.lt.s32.totalorder %s16, 5
      %p166 = pnand %p164, %p165
      %p167 = pneg %p166
      // Predicated region
      $region25: #{tpu_custom_call.1} parent=5 // pred_check
        _
      $region26: #{tpu_custom_call.1} parent=5 // pred_check_branch
        %169 = sbr.rel (%p166) target = $region28
      $region27: #{tpu_custom_call.1} parent=5 // pred_region
        %s170 = ssub.s32 %s16, 1
        %s171 = sand.u32 %s29, 1
        %s172 = scalar_lea.sflag [#allocation5], %s171
        %s173 = sand.u32 %s29, 1
        %s174 = smul.addr %s173, 128
        %s175 = scalar_lea.vmem [#allocation4], %s174
        // Predicated region
        $region29: #{tpu_custom_call.1} parent=27 // pred_check
          %p176 = pneg %p42
        $region30: #{tpu_custom_call.1} parent=27 // pred_check_branch
          %178 = sbr.rel (%p176) target = $region32
        $region31: #{tpu_custom_call.1} parent=27 // pred_region
          %179 = dma.done %s172, 2048
        $region32: #{tpu_custom_call.1} parent=27 // pred_fallthru
          _
        // Predicated region
        $region33: #{tpu_custom_call.1} parent=27 // pred_check
          %p180 = pneg %p63
        $region34: #{tpu_custom_call.1} parent=27 // pred_check_branch
          %182 = sbr.rel (%p180) target = $region36
        $region35: #{tpu_custom_call.1} parent=27 // pred_region
          %183 = dma.done [#allocation8], 256
        $region36: #{tpu_custom_call.1} parent=27 // pred_fallthru
          _
        %s184 = sand.u32 %s29, 1
        %s185 = scalar_lea.sflag [#allocation5], %s184
        %s186 = sand.u32 %s29, 1
        %s187 = smul.addr %s186, 128
        %s188 = scalar_lea.vmem [#allocation4], %s187
        %p189 = pneg %p42
        %p190 = pneg %p39
        %p191 = pneg %p63
        %p192 = pneg %p60
        %p193 = pneg %p84
        %p194 = pneg %p81
        %p195 = pneg %p105
        %p196 = pneg %p102
        %s197 = smul.u32 16, %s21
        %s198 = ssub.s32 63, %s197
        %p199 = scmp.lt.s32.totalorder %s198, 16
        %s200 = scalar_select %p199, %s198, 16
        %s201 = smul.u32 128, %s200
        %p202 = scmp.eq.s32.totalorder %s21, 0
        // Predicated region
        $region37: #{tpu_custom_call.1} parent=27 // pred_check
          %p203 = pneg %p202
        $region38: #{tpu_custom_call.1} parent=27 // pred_check_branch
          %205 = sbr.rel (%p203) target = $region40
        $region39: #{tpu_custom_call.1} parent=27 // pred_region
          %206 = vst [vmem:[#allocation2] sm:$0x1] -inf
          %207 = vst [vmem:[#allocation3] sm:$0x1] 0.0
        $region40: #{tpu_custom_call.1} parent=27 // pred_fallthru
          _
        %v208 = vld [vmem:[%s175] sm:$0xff]
        %v209 = vld [vmem:[%s175 + $0x8] sm:$0xff]
        %v210 = vld [vmem:[%s175 + $0x10] sm:$0xff]
        %v211 = vld [vmem:[%s175 + $0x18] sm:$0xff]
        %v212 = vld [vmem:[%s175 + $0x20] sm:$0xff]
        %v213 = vld [vmem:[%s175 + $0x28] sm:$0xff]
        %v214 = vld [vmem:[%s175 + $0x30] sm:$0xff]
        %v215 = vld [vmem:[%s175 + $0x38] sm:$0xff]
        %v216 = vld [vmem:[%s175 + $0x40] sm:$0xff]
        %v217 = vld [vmem:[%s175 + $0x48] sm:$0xff]
        %v218 = vld [vmem:[%s175 + $0x50] sm:$0xff]
        %v219 = vld [vmem:[%s175 + $0x58] sm:$0xff]
        %v220 = vld [vmem:[%s175 + $0x60] sm:$0xff]
        %v221 = vld [vmem:[%s175 + $0x68] sm:$0xff]
        %v222 = vld [vmem:[%s175 + $0x70] sm:$0xff]
        %v223 = vld [vmem:[%s175 + $0x78] sm:$0xff]
        %v224 = vlaneseq
        %v225 = vshrl.u32 %v224, 7
        %v226 = vadd.s32 %v225, 8
        %v227 = vadd.s32 %v225, 16
        %v228 = vadd.s32 %v225, 24
        %v229 = vadd.s32 %v225, 32
        %v230 = vadd.s32 %v225, 40
        %v231 = vadd.s32 %v225, 48
        %v232 = vadd.s32 %v225, 56
        %v233 = vadd.s32 %v225, 64
        %v234 = vadd.s32 %v225, 72
        %v235 = vadd.s32 %v225, 80
        %v236 = vadd.s32 %v225, 88
        %v237 = vadd.s32 %v225, 96
        %v238 = vadd.s32 %v225, 104
        %v239 = vadd.s32 %v225, 112
        %v240 = vadd.s32 %v225, 120
        %s241 = smul.u32 %s21, 128
        %v242 = vstv %s241
        %v243 = vadd.s32 %v225, %v242
        %v244 = vadd.s32 %v226, %v242
        %v245 = vadd.s32 %v227, %v242
        %v246 = vadd.s32 %v228, %v242
        %v247 = vadd.s32 %v229, %v242
        %v248 = vadd.s32 %v230, %v242
        %v249 = vadd.s32 %v231, %v242
        %v250 = vadd.s32 %v232, %v242
        %v251 = vadd.s32 %v233, %v242
        %v252 = vadd.s32 %v234, %v242
        %v253 = vadd.s32 %v235, %v242
        %v254 = vadd.s32 %v236, %v242
        %v255 = vadd.s32 %v237, %v242
        %v256 = vadd.s32 %v238, %v242
        %v257 = vadd.s32 %v239, %v242
        %v258 = vadd.s32 %v240, %v242
        %vm259 = vcmp.lt.s32.totalorder %v243, 500
        %vm260 = vcmp.lt.s32.totalorder %v244, 500
        %vm261 = vcmp.lt.s32.totalorder %v245, 500
        %vm262 = vcmp.lt.s32.totalorder %v246, 500
        %vm263 = vcmp.lt.s32.totalorder %v247, 500
        %vm264 = vcmp.lt.s32.totalorder %v248, 500
        %vm265 = vcmp.lt.s32.totalorder %v249, 500
        %vm266 = vcmp.lt.s32.totalorder %v250, 500
        %vm267 = vcmp.lt.s32.totalorder %v251, 500
        %vm268 = vcmp.lt.s32.totalorder %v252, 500
        %vm269 = vcmp.lt.s32.totalorder %v253, 500
        %vm270 = vcmp.lt.s32.totalorder %v254, 500
        %vm271 = vcmp.lt.s32.totalorder %v255, 500
        %vm272 = vcmp.lt.s32.totalorder %v256, 500
        %vm273 = vcmp.lt.s32.totalorder %v257, 500
        %vm274 = vcmp.lt.s32.totalorder %v258, 500
        %v275 = vsel %vm259, %v208, -inf
        %v276 = vsel %vm260, %v209, -inf
        %v277 = vsel %vm261, %v210, -inf
        %v278 = vsel %vm262, %v211, -inf
        %v279 = vsel %vm263, %v212, -inf
        %v280 = vsel %vm264, %v213, -inf
        %v281 = vsel %vm265, %v214, -inf
        %v282 = vsel %vm266, %v215, -inf
        %v283 = vsel %vm267, %v216, -inf
        %v284 = vsel %vm268, %v217, -inf
        %v285 = vsel %vm269, %v218, -inf
        %v286 = vsel %vm270, %v219, -inf
        %v287 = vsel %vm271, %v220, -inf
        %v288 = vsel %vm272, %v221, -inf
        %v289 = vsel %vm273, %v222, -inf
        %v290 = vsel %vm274, %v223, -inf
        %v291 = vmax.f32 %v275, %v279
        %v292 = vmax.f32 %v276, %v280
        %v293 = vmax.f32 %v277, %v281
        %v294 = vmax.f32 %v278, %v282
        %v295 = vmax.f32 %v291, %v283
        %v296 = vmax.f32 %v292, %v284
        %v297 = vmax.f32 %v293, %v285
        %v298 = vmax.f32 %v294, %v286
        %v299 = vmax.f32 %v295, %v287
        %v300 = vmax.f32 %v296, %v288
        %v301 = vmax.f32 %v297, %v289
        %v302 = vmax.f32 %v298, %v290
        %v303 = vmax.f32 %v299, %v300
        %v304 = vmax.f32 %v301, %v302
        %v305 = vmax.f32 %v303, %v304
        %v306 = vrot.slane %v305, 4
        %v307 = vmax.f32 %v305, %v306
        %v308 = vrot.slane %v307, 2
        %v309 = vmax.f32 %v307, %v308
        %v310 = vrot.slane %v309, 1
        %v311 = vmax.f32 %v309, %v310
        %v312 = vld [vmem:[#allocation2] sm:$0x1]
        %v313 = vmax.f32 %v312, %v311
        %v314 = vld [vmem:[#allocation3] sm:$0x1]
        %v315 = vsub.f32 %v312, %v313
        %v316 = vmul.f32 %v315, 1.442695
        %v317 = vpow.pop %v316
        %v318 = vmul.f32 %v314, %v317
        %v320 = vlaneseq
        %v321 = vshrl.u32 %v320, 7
        %v322 = vsub.s32 0, %v321
        %v323 = vrot.slane %v313, %v322
        %v325 = vsub.f32 %v275, %v323
        %v326 = vsub.f32 %v276, %v323
        %v327 = vsub.f32 %v277, %v323
        %v328 = vsub.f32 %v278, %v323
        %v329 = vsub.f32 %v279, %v323
        %v330 = vsub.f32 %v280, %v323
        %v331 = vsub.f32 %v281, %v323
        %v332 = vsub.f32 %v282, %v323
        %v333 = vsub.f32 %v283, %v323
        %v334 = vsub.f32 %v284, %v323
        %v335 = vsub.f32 %v285, %v323
        %v336 = vsub.f32 %v286, %v323
        %v337 = vsub.f32 %v287, %v323
        %v338 = vsub.f32 %v288, %v323
        %v339 = vsub.f32 %v289, %v323
        %v340 = vsub.f32 %v290, %v323
        %v341 = vmul.f32 %v325, 1.442695
        %v342 = vpow.pop %v341
        %v343 = vmul.f32 %v326, 1.442695
        %v344 = vpow.pop %v343
        %v345 = vmul.f32 %v327, 1.442695
        %v346 = vpow.pop %v345
        %v347 = vmul.f32 %v328, 1.442695
        %v348 = vpow.pop %v347
        %v349 = vmul.f32 %v329, 1.442695
        %v350 = vpow.pop %v349
        %v351 = vmul.f32 %v330, 1.442695
        %v352 = vpow.pop %v351
        %v353 = vmul.f32 %v331, 1.442695
        %v354 = vpow.pop %v353
        %v355 = vmul.f32 %v332, 1.442695
        %v356 = vpow.pop %v355
        %v357 = vmul.f32 %v333, 1.442695
        %v358 = vpow.pop %v357
        %v359 = vmul.f32 %v334, 1.442695
        %v360 = vpow.pop %v359
        %v361 = vmul.f32 %v335, 1.442695
        %v362 = vpow.pop %v361
        %v363 = vmul.f32 %v336, 1.442695
        %v364 = vpow.pop %v363
        %v365 = vmul.f32 %v337, 1.442695
        %v366 = vpow.pop %v365
        %v367 = vmul.f32 %v338, 1.442695
        %v368 = vpow.pop %v367
        %v369 = vmul.f32 %v339, 1.442695
        %v370 = vpow.pop %v369
        %v371 = vmul.f32 %v340, 1.442695
        %v372 = vpow.pop %v371
        %v373 = vadd.f32 %v342, %v344
        %v374 = vadd.f32 %v373, %v346
        %v375 = vadd.f32 %v374, %v348
        %v376 = vadd.f32 %v375, %v350
        %v377 = vadd.f32 %v376, %v352
        %v378 = vadd.f32 %v377, %v354
        %v379 = vadd.f32 %v378, %v356
        %v380 = vadd.f32 %v379, %v358
        %v381 = vadd.f32 %v380, %v360
        %v382 = vadd.f32 %v381, %v362
        %v383 = vadd.f32 %v382, %v364
        %v384 = vadd.f32 %v383, %v366
        %v385 = vadd.f32 %v384, %v368
        %v386 = vadd.f32 %v385, %v370
        %v387 = vadd.f32 %v386, %v372
        %v388 = vrot.slane %v387, 4
        %v389 = vadd.f32 %v387, %v388
        %v390 = vrot.slane %v389, 2
        %v391 = vadd.f32 %v389, %v390
        %v392 = vrot.slane %v391, 1
        %v393 = vadd.f32 %v391, %v392
        %v394 = vadd.f32 %v318, %v393
        %395 = vst [vmem:[#allocation3] sm:$0x1] %v394
        %396 = vst [vmem:[#allocation2] sm:$0x1] %v313
        %p397 = scmp.eq.s32.totalorder %s21, 3
        // Predicated region
        $region41: #{tpu_custom_call.1} parent=27 // pred_check
          %p398 = pneg %p397
        $region42: #{tpu_custom_call.1} parent=27 // pred_check_branch
          %400 = sbr.rel (%p398) target = $region44
        $region43: #{tpu_custom_call.1} parent=27 // pred_region
          %v401 = vld [vmem:[#allocation2] sm:$0x1]
          %v402 = vld [vmem:[#allocation3] sm:$0x1]
          %403 = vrot.lane.b32.xlu0 %v401, 64
          %v404 = vpop.permute.xlu0 %403
          %405 = vrot.lane.b32.xlu0 %v402, 64
          %v406 = vpop.permute.xlu0 %405
          %v407 = vmax.f32 %v401, %v404
          %v408 = vsub.f32 %v401, %v407
          %v409 = vmul.f32 %v408, 1.442695
          %v410 = vpow.pop %v409
          %v411 = vmul.f32 %v402, %v410
          %v412 = vsub.f32 %v404, %v407
          %v413 = vmul.f32 %v412, 1.442695
          %v414 = vpow.pop %v413
          %v415 = vmul.f32 %v406, %v414
          %v416 = vadd.f32 %v411, %v415
          %417 = vrot.lane.b32.xlu0 %v407, 96
          %v418 = vpop.permute.xlu0 %417
          %419 = vrot.lane.b32.xlu0 %v416, 96
          %v420 = vpop.permute.xlu0 %419
          %v421 = vmax.f32 %v407, %v418
          %v422 = vsub.f32 %v407, %v421
          %v423 = vmul.f32 %v422, 1.442695
          %v424 = vpow.pop %v423
          %v425 = vmul.f32 %v416, %v424
          %v426 = vsub.f32 %v418, %v421
          %v427 = vmul.f32 %v426, 1.442695
          %v428 = vpow.pop %v427
          %v429 = vmul.f32 %v420, %v428
          %v430 = vadd.f32 %v425, %v429
          %431 = vrot.lane.b32.xlu0 %v421, 112
          %v432 = vpop.permute.xlu0 %431
          %433 = vrot.lane.b32.xlu0 %v430, 112
          %v434 = vpop.permute.xlu0 %433
          %v435 = vmax.f32 %v421, %v432
          %v436 = vsub.f32 %v421, %v435
          %v437 = vmul.f32 %v436, 1.442695
          %v438 = vpow.pop %v437
          %v439 = vmul.f32 %v430, %v438
          %v440 = vsub.f32 %v432, %v435
          %v441 = vmul.f32 %v440, 1.442695
          %v442 = vpow.pop %v441
          %v443 = vmul.f32 %v434, %v442
          %v444 = vadd.f32 %v439, %v443
          %v445 = vlog2.pop %v444
          %v446 = vmul.f32 %v445, 0.6931472
          %v447 = vadd.f32 %v435, %v446
          %vm448 = vcmask 122880
          %449 = vst.msk [vmem:[#allocation9] sm:$0x1] %vm448, %v447
          %v450 = vld [vmem:[#allocation7] sm:$0xff]
          %v451 = vld [vmem:[#allocation7 + $0x8] sm:$0xff]
          %vm452 = vcmask 130048
          %v453 = vsel %vm452, %v450, -inf
          %454 = vmax.xlane.f32.xlu0 %v453
          %v455 = vpop.xlane.xlu0 %454
          %v456 = vsel %vm452, %v451, -inf
          %457 = vmax.xlane.f32.xlu0 %v456
          %v458 = vpop.xlane.xlu0 %457
          %v459 = vsub.f32 %v450, %v455
          %v460 = vsub.f32 %v451, %v458
          %v461 = vmul.f32 %v459, 1.442695
          %v462 = vpow.pop %v461
          %v463 = vmul.f32 %v460, 1.442695
          %v464 = vpow.pop %v463
          %v465 = vsel %vm452, %v462, 0.0
          %466 = vadd.xlane.f32.xlu0 %v465
          %v467 = vpop.xlane.xlu0 %466
          %v468 = vsel %vm452, %v464, 0.0
          %469 = vadd.xlane.f32.xlu0 %v468
          %v470 = vpop.xlane.xlu0 %469
          %v471 = vlog2.pop %v467
          %v472 = vmul.f32 %v471, 0.6931472
          %v473 = vlog2.pop %v470
          %v474 = vmul.f32 %v473, 0.6931472
          %v475 = vadd.f32 %v472, %v455
          %v476 = vadd.f32 %v474, %v458
          %v477 = vsub.f32 %v450, %v475
          %v478 = vsub.f32 %v451, %v476
          %479 = vst.msk [vmem:[#allocation10] sm:$0xff] %vm452, %v477
          %480 = vst.msk [vmem:[#allocation10 + $0x8] sm:$0xff] %vm452, %v478
        $region44: #{tpu_custom_call.1} parent=27 // pred_fallthru
          _
        // Predicated region
        $region45: #{tpu_custom_call.1} parent=27 // pred_check
          %p481 = pneg %p81
        $region46: #{tpu_custom_call.1} parent=27 // pred_check_branch
          %483 = sbr.rel (%p481) target = $region48
        $region47: #{tpu_custom_call.1} parent=27 // pred_region
          %s485 = ssub.s32 16, 16
          %486 = vsyncadd [#allocation6], %s485
          %s488 = sshll.u32 [#allocation9], 4
          %s489 = int_to_ptr.vmem [resolvable:$true] %s488
          %491 = dma.vmem_to_hbm [thread:$0]  %s489, 16, %s2, [#allocation6]
        $region48: #{tpu_custom_call.1} parent=27 // pred_fallthru
          _
        // Predicated region
        $region49: #{tpu_custom_call.1} parent=27 // pred_check
          %p492 = pneg %p102
        $region50: #{tpu_custom_call.1} parent=27 // pred_check_branch
          %494 = sbr.rel (%p492) target = $region52
        $region51: #{tpu_custom_call.1} parent=27 // pred_region
          %s496 = ssub.s32 256, 256
          %497 = vsyncadd [#allocation11], %s496
          %s498 = sshll.u32 [#allocation10], 4
          %s499 = int_to_ptr.vmem [resolvable:$true] %s498
          %504 = dma.vmem_to_hbm [thread:$0]  %s499, 256, %s3, [#allocation11], 128, 128, 8
        $region52: #{tpu_custom_call.1} parent=27 // pred_fallthru
          _
        // Predicated region
        $region53: #{tpu_custom_call.1} parent=27 // pred_check
          %p505 = pneg %p81
        $region54: #{tpu_custom_call.1} parent=27 // pred_check_branch
          %507 = sbr.rel (%p505) target = $region56
        $region55: #{tpu_custom_call.1} parent=27 // pred_region
          %508 = dma.done [#allocation6], 16
        $region56: #{tpu_custom_call.1} parent=27 // pred_fallthru
          _
        // Predicated region
        $region57: #{tpu_custom_call.1} parent=27 // pred_check
          %p509 = pneg %p102
        $region58: #{tpu_custom_call.1} parent=27 // pred_check_branch
          %511 = sbr.rel (%p509) target = $region60
        $region59: #{tpu_custom_call.1} parent=27 // pred_region
          %512 = dma.done [#allocation11], 256
        $region60: #{tpu_custom_call.1} parent=27 // pred_fallthru
          _
      $region28: #{tpu_custom_call.1} parent=5 // pred_fallthru
        _
      %p513 = scmp.le.s32.totalorder 2, %s16
      // Predicated region
      $region61: #{tpu_custom_call.1} parent=5 // pred_check
        %p514 = pneg %p513
      $region62: #{tpu_custom_call.1} parent=5 // pred_check_branch
        %516 = sbr.rel (%p514) target = $region64
      $region63: #{tpu_custom_call.1} parent=5 // pred_region
        %s517 = ssub.s32 %s16, 2
      $region64: #{tpu_custom_call.1} parent=5 // pred_fallthru
        _
    $region6: #{tpu_custom_call.1} parent=1 // loop_footer
      %s20 = sadd.s32 1, %s16
    $region7: #{tpu_custom_call.1} parent=1 // loop_footer_branch
      %15 = sbr.rel target = $region3
    $region8: #{tpu_custom_call.1} parent=1 // loop_exit
      _
    %518 = vsyncpa [#allocation5], 1
    %s519 = scalar_lea.sflag [#allocation5], 1
    %520 = vsyncpa %s519, 1
    %521 = vsyncpa [#allocation8], 1
    %522 = vsyncpa [#allocation6], 1
    %s523 = scalar_lea.sflag [#allocation6], 1
    %524 = vsyncpa %s523, 1
    %525 = vsyncpa [#allocation11], 1

</llo_original>
